<compile_context>
chip_gen: v7x
topology: tpu7x:2x2x1
jax: 0.10.0
libtpu: 0.0.40
codegen_flags: <defaults>
</compile_context>

<pallas_src>
import jax
import jax.numpy as jnp
from jax import lax
from jax.experimental import pallas as pl
from jax.experimental.pallas import tpu as pltpu


# ---------------------------------------------------------------------------
# Hardware-aware sizing helpers
# ---------------------------------------------------------------------------

def _vmem_capacity_bytes() -> int:
    """Physical VMEM per TensorCore; conservative (v7x-safe) fallback."""
    try:
        cap = getattr(pltpu.get_tpu_info(), "vmem_capacity_bytes", None)
        if cap:
            return int(cap)
    except Exception:
        pass
    try:
        kind = jax.devices()[0].device_kind.lower()
        if "v5" in kind or "v6" in kind:
            return 128 * 1024 * 1024
    except Exception:
        pass
    return 64 * 1024 * 1024


def _round_up(x: int, m: int) -> int:
    return ((x + m - 1) // m) * m


# Rough per-grid-step live-VMEM models (bytes):
#  whole-HW path: double-buffered f32 in/out blocks (16 B/elem) + bf16 copy +
#                 f32 att + slack  ->  ~28 B per (bt, C, HW) element, plus the
#                 (bt, C, C) softmax temporaries.
#  tiled path:    double-buffered f32 in/out tiles + bf16/f32 tile temporaries
#                 ->  ~22 B per (bt, C, thw) element, plus the (bt, C, C)
#                 affinity accumulator and softmax temporaries.
def _whole_footprint(bt, C, HW):
    return 28 * bt * C * HW + 16 * bt * C * C


def _tiled_footprint(bt, C, thw):
    return 22 * bt * C * thw + 16 * bt * C * C


def _plan(B, C, HW, budget, force_tiled, hw_tile):
    """Choose (mode, batch_tile, hw_tile)."""
    # Cap bt so the batch grid keeps >= 2 steps whenever B >= 2: gives both
    # v7x TensorCores work on the "parallel" axis and keeps the auto-pipeline
    # overlapped.  No divisor constraint on B (grid uses pl.cdiv).
    max_bt = pl.cdiv(B, 2) if B >= 2 else 1

    if not force_tiled:
        for bt in range(max_bt, 0, -1):
            if _whole_footprint(bt, C, HW) <= budget:
                return "whole", bt, HW

    hw_cap = _round_up(HW, 128)
    if hw_tile is not None:
        thw = min(_round_up(hw_tile, 128), hw_cap)
        for bt in range(max_bt, 0, -1):
            if _tiled_footprint(bt, C, thw) <= budget:
                return "tiled", bt, thw
        return "tiled", 1, thw

    for bt in range(max_bt, 0, -1):
        fit = (budget - 16 * bt * C * C) // (22 * bt * C)
        thw = min(hw_cap, (fit // 128) * 128)
        if thw >= 128:
            return "tiled", bt, thw
    # Last resort: minimal tiles even if the model says it's over budget.
    return "tiled", 1, min(128, hw_cap)


# ---------------------------------------------------------------------------
# Kernels
# ---------------------------------------------------------------------------

def _make_whole_kernel(aff_dtype):
    """Whole-HW path: one (bt, C, HW) block does everything."""

    def kernel(gamma_ref, x_ref, o_ref):
        x = x_ref[...]                                   # (bt, C, HW)
        xa = x.astype(aff_dtype)
        # affinity[b, i, j] = sum_d x[b,i,d] * x[b,j,d]: contract the last dim
        # of both operands directly -- no materialized transpose.
        aff = lax.dot_general(
            xa, xa,
            dimension_numbers=(((2,), (2,)), ((0,), (0,))),
            preferred_element_type=jnp.float32)          # (bt, C, C) f32
        # softmax(rowmax - aff) == softmax(-aff); stabilize with the row min so
        # the exponent is always <= 0: one reduction + one exp pass.
        rowmin = jnp.min(aff, axis=-1, keepdims=True)
        e = jnp.exp(rowmin - aff)
        denom = jnp.sum(e, axis=-1, keepdims=True)
        p = e * pl.reciprocal(denom, approx=True)        # EUP slot, ~free
        # att[b, i, d] = sum_j p[b,i,j] * x[b,j,d]  (bf16 MXU operands, f32 acc)
        att = lax.dot_general(
            p.astype(jnp.bfloat16), x.astype(jnp.bfloat16),
            dimension_numbers=(((2,), (1,)), ((0,), (0,))),
            preferred_element_type=jnp.float32)          # (bt, C, HW) f32
        o_ref[...] = (gamma_ref[0] * att + x.astype(jnp.float32)).astype(o_ref.dtype)

    return kernel


def _make_tiled_kernel(hw, hw_tile, aff_dtype):
    """HW-tiled two-pass path.  Grid = (nb, 2, nhw); pass 0 accumulates the
    affinity (+ softmax at the last tile), pass 1 applies p @ x + residual."""
    ragged = (hw % hw_tile) != 0

    def kernel(gamma_ref, x_ref, o_ref, acc_ref):
        pas = pl.program_id(1)
        h = pl.program_id(2)
        nh = pl.num_programs(2)

        @pl.when((pas == 0) & (h == 0))
        def _init():
            acc_ref[...] = jnp.zeros_like(acc_ref)

        @pl.when(pas == 0)
        def _accumulate():
            x = x_ref[...]                               # (bt, C, hw_tile)
            if ragged:
                # Zero the out-of-range lanes of the last tile so they add 0
                # to the affinity contraction.
                lane = lax.broadcasted_iota(jnp.int32, x.shape, 2)
                x = jnp.where(h * hw_tile + lane < hw, x, jnp.zeros_like(x))
            xa = x.astype(aff_dtype)
            acc_ref[...] += lax.dot_general(
                xa, xa,
                dimension_numbers=(((2,), (2,)), ((0,), (0,))),
                preferred_element_type=jnp.float32)

        @pl.when((pas == 0) & (h == nh - 1))
        def _softmax():
            aff = acc_ref[...]
            rowmin = jnp.min(aff, axis=-1, keepdims=True)
            e = jnp.exp(rowmin - aff)
            denom = jnp.sum(e, axis=-1, keepdims=True)
            acc_ref[...] = e * pl.reciprocal(denom, approx=True)   # reuse as p

        @pl.when(pas == 1)
        def _apply():
            x = x_ref[...]
            att = lax.dot_general(
                acc_ref[...].astype(jnp.bfloat16), x.astype(jnp.bfloat16),
                dimension_numbers=(((2,), (1,)), ((0,), (0,))),
                preferred_element_type=jnp.float32)
            o_ref[...] = (gamma_ref[0] * att + x.astype(jnp.float32)).astype(o_ref.dtype)

    return kernel


# ---------------------------------------------------------------------------
# Wrapper
# ---------------------------------------------------------------------------

def channel_attention_block(x: jax.Array, gamma: jax.Array, *,
                            affinity_in_bf16: bool = False,
                            out_dtype=None,
                            force_tiled: bool = False,
                            hw_tile=None) -> jax.Array:
    """x: (B, C, H, W), gamma: (1,) -> (B, C, H, W).  Matches the PyTorch module.

    out_dtype: optional narrower output dtype (e.g. bf16) to halve store
    traffic on mem-bound shapes (notably v5e); residual math stays f32.
    """
    B, C, H, W = x.shape
    HW = H * W
    x3 = x.reshape(B, C, HW)                 # unpadded: full-dim blocks are legal
    gamma = jnp.asarray(gamma, dtype=jnp.float32).reshape((1,))
    out_dtype = out_dtype or x.dtype

    cap = _vmem_capacity_bytes()
    vmem_limit = int(cap * 0.75)             # headroom for Mosaic internal scratch
    budget = int(cap * 0.60)

    aff_dtype = jnp.bfloat16 if affinity_in_bf16 else jnp.float32
    mode, bt, thw = _plan(B, C, HW, budget, force_tiled, hw_tile)
    nb = pl.cdiv(B, bt)

    if mode == "whole":
        out3 = pl.pallas_call(
            _make_whole_kernel(aff_dtype),
            out_shape=jax.ShapeDtypeStruct((B, C, HW), out_dtype),
            grid_spec=pltpu.PrefetchScalarGridSpec(
                num_scalar_prefetch=0,
                grid=(nb,),
                in_specs=[
                    pl.BlockSpec(memory_space=pltpu.MemorySpace.SMEM),  # gamma
                    pl.BlockSpec((bt, C, HW), lambda b: (b, 0, 0)),
                ],
                out_specs=pl.BlockSpec((bt, C, HW), lambda b: (b, 0, 0)),
            ),
            compiler_params=pltpu.CompilerParams(
                dimension_semantics=("parallel",),
                vmem_limit_bytes=vmem_limit,
            ),
        )(gamma, x3)
    else:
        nhw = pl.cdiv(HW, thw)
        out3 = pl.pallas_call(
            _make_tiled_kernel(HW, thw, aff_dtype),
            out_shape=jax.ShapeDtypeStruct((B, C, HW), out_dtype),
            grid_spec=pltpu.PrefetchScalarGridSpec(
                num_scalar_prefetch=0,
                # axis 1 is the pass: 0 = affinity accumulation (+softmax),
                # 1 = p @ x_tile + residual.
                grid=(nb, 2, nhw),
                in_specs=[
                    pl.BlockSpec(memory_space=pltpu.MemorySpace.SMEM),  # gamma
                    pl.BlockSpec((bt, C, thw), lambda b, p, h: (b, 0, h)),
                ],
                # Output block index advances only in pass 1 (h * p), so no
                # garbage / duplicate HBM writeback happens during pass 0.
                out_specs=pl.BlockSpec((bt, C, thw), lambda b, p, h: (b, 0, h * p)),
                scratch_shapes=[pltpu.VMEM((bt, C, C), jnp.float32)],
            ),
            compiler_params=pltpu.CompilerParams(
                dimension_semantics=("parallel", "arbitrary", "arbitrary"),
                vmem_limit_bytes=vmem_limit,
            ),
        )(gamma, x3)
        # TODO(synk): deepen the x input pipeline (pipeline_mode=pl.Buffered(3))
        # once verified on the target jax version; the affinity pass is
        # DMA-bound at small C.

    return out3.reshape(B, C, H, W)


# ---------------------------------------------------------------------------
# Reference + test
# ---------------------------------------------------------------------------

def _reference(x: jax.Array, gamma: jax.Array) -> jax.Array:
    B, C, H, W = x.shape
    q = x.reshape(B, C, -1)
    aff = jnp.matmul(q, jnp.transpose(q, (0, 2, 1)))
    aff = jnp.max(aff, axis=-1, keepdims=True) - aff
    p = jax.nn.softmax(aff, axis=-1)
    att = jnp.matmul(p, q).reshape(B, C, H, W)
    return gamma * att + x


if __name__ == "__main__":
    key = jax.random.PRNGKey(0)
    k0, k1 = jax.random.split(key)

    # nn.Parameter(torch.zeros(1)) -> shape (1,).  Torch init is 0.0; use a
    # deterministic nonzero value so the attention path is actually exercised.
    gamma = jnp.array([0.5], dtype=jnp.float32)

    # Main shape: B=2, C=4, H=W=16 (HW = 256, lane-aligned).
    B, C, H, W = 2, 4, 16, 16
    x = jax.random.normal(k0, (B, C, H, W), dtype=jnp.float32)
    ref = _reference(x, gamma)

    out = jax.block_until_ready(channel_attention_block(x, gamma))
    assert out.shape == (B, C, H, W)
    assert jnp.allclose(out, ref, atol=5e-2, rtol=5e-2), "whole-HW path mismatch"

    # Exercise the HW-tiled (v7x / large-shape) fallback on the same input.
    out_t = jax.block_until_ready(
        channel_attention_block(x, gamma, force_tiled=True, hw_tile=128))
    assert jnp.allclose(out_t, ref, atol=5e-2, rtol=5e-2), "tiled path mismatch"

    # Ragged HW (no wrapper padding/slice): H*W = 169 is not a 128 multiple.
    x2 = jax.random.normal(k1, (B, C, 13, 13), dtype=jnp.float32)
    ref2 = _reference(x2, gamma)

    out2 = jax.block_until_ready(channel_attention_block(x2, gamma))
    assert jnp.allclose(out2, ref2, atol=5e-2, rtol=5e-2), "ragged whole-HW mismatch"

    out2_t = jax.block_until_ready(
        channel_attention_block(x2, gamma, force_tiled=True, hw_tile=128))
    assert jnp.allclose(out2_t, ref2, atol=5e-2, rtol=5e-2), "ragged tiled mismatch"

    print("KERNEL_OK")
</pallas_src>

<mosaic_0001>
module attributes {stable_mosaic.version = 11 : i64} {
  func.func @kernel(%arg0: i32, %arg1: memref<1xf32, #tpu.memory_space<smem>>, %arg2: memref<1x4x256xf32, #tpu.memory_space<vmem>>, %arg3: memref<1x4x256xf32, #tpu.memory_space<vmem>>) attributes {dimension_semantics = [#tpu.dimension_semantics<parallel>], iteration_bounds = array<i64: 2>, scalar_prefetch = 0 : i64, scratch_operands = 0 : i64, tpu.core_type = #tpu.core_type<tc>, window_params = [{transform_indices = @transform_0, window_bounds = array<i64: 1>}, {transform_indices = @transform_1, window_bounds = array<i64: 1, 4, 256>}, {transform_indices = @transform_2, window_bounds = array<i64: 1, 4, 256>}]} {
    %c0 = arith.constant 0 : index
    %c0_0 = arith.constant 0 : index
    %c0_1 = arith.constant 0 : index
    %0 = vector.load %arg2[%c0, %c0_0, %c0_1] : memref<1x4x256xf32, #tpu.memory_space<vmem>>, vector<1x4x256xf32>
    %cst = arith.constant dense<0.000000e+00> : vector<1x4x4xf32>
    %1 = tpu.matmul %0, %0, %cst {dimension_numbers = #tpu.dot_dimension_numbers<[2], [2], [1], [1], [0, 0, 0, 1, 1, 1], [0], [0]>} : vector<1x4x256xf32>, vector<1x4x256xf32>, vector<1x4x4xf32> -> vector<1x4x4xf32>
    %cst_2 = arith.constant dense<0x7F800000> : vector<1x4xf32>
    %2 = vector.multi_reduction <minimumf>, %1, %cst_2 [2] : vector<1x4x4xf32> to vector<1x4xf32>
    %3 = vector.shape_cast %2 : vector<1x4xf32> to vector<1x4x1xf32>
    %4 = vector.broadcast %3 : vector<1x4x1xf32> to vector<1x4x4xf32>
    %5 = arith.subf %4, %1 : vector<1x4x4xf32>
    %6 = math.exp %5 : vector<1x4x4xf32>
    %cst_3 = arith.constant dense<0.000000e+00> : vector<1x4xf32>
    %7 = vector.multi_reduction <add>, %6, %cst_3 [2] : vector<1x4x4xf32> to vector<1x4xf32>
    %8 = vector.shape_cast %7 : vector<1x4xf32> to vector<1x4x1xf32>
    %9 = tpu.reciprocal %8 {approx = true} : vector<1x4x1xf32> -> vector<1x4x1xf32>
    %10 = vector.broadcast %9 : vector<1x4x1xf32> to vector<1x4x4xf32>
    %11 = arith.mulf %6, %10 : vector<1x4x4xf32>
    %12 = arith.truncf %11 : vector<1x4x4xf32> to vector<1x4x4xbf16>
    %13 = arith.truncf %0 : vector<1x4x256xf32> to vector<1x4x256xbf16>
    %cst_4 = arith.constant dense<0.000000e+00> : vector<1x4x256xf32>
    %14 = tpu.matmul %12, %13, %cst_4 {dimension_numbers = #tpu.dot_dimension_numbers<[2], [1], [1], [2], [0, 0, 0, 1, 1, 2], [0], [0]>} : vector<1x4x4xbf16>, vector<1x4x256xbf16>, vector<1x4x256xf32> -> vector<1x4x256xf32>
    %c0_5 = arith.constant 0 : index
    %15 = memref.load %arg1[%c0_5] : memref<1xf32, #tpu.memory_space<smem>>
    %16 = vector.broadcast %15 : f32 to vector<1x4x256xf32>
    %17 = arith.mulf %16, %14 : vector<1x4x256xf32>
    %18 = arith.addf %17, %0 : vector<1x4x256xf32>
    %c0_6 = arith.constant 0 : index
    %c0_7 = arith.constant 0 : index
    %c0_8 = arith.constant 0 : index
    %19 = vector.load %arg3[%c0_6, %c0_7, %c0_8] : memref<1x4x256xf32, #tpu.memory_space<vmem>>, vector<1x4x256xf32>
    tpu.vector_store %arg3[%c0_6, %c0_7, %c0_8], %18 {strides = array<i32>} : memref<1x4x256xf32, #tpu.memory_space<vmem>>, vector<1x4x256xf32>,
    return
  }
  func.func @transform_0(%arg0: i32) -> i32 {
    %c0_i32 = arith.constant 0 : i32
    %c0_i32_0 = arith.constant 0 : i32
    return %c0_i32 : i32
  }
  func.func @transform_1(%arg0: i32) -> (i32, i32, i32) {
    %c0_i32 = arith.constant 0 : i32
    %c0_i32_0 = arith.constant 0 : i32
    %c0_i32_1 = arith.constant 0 : i32
    return %arg0, %c0_i32, %c0_i32_0 : i32, i32, i32
  }
  func.func @transform_2(%arg0: i32) -> (i32, i32, i32) {
    %c0_i32 = arith.constant 0 : i32
    %c0_i32_0 = arith.constant 0 : i32
    %c0_i32_1 = arith.constant 0 : i32
    return %arg0, %c0_i32, %c0_i32_0 : i32, i32, i32
  }
}

</mosaic_0001>

<llo_original>
// kernel: tpu_custom_call.1
$region0: #{tpu_custom_call.1}
  #allocation0 [shape = 'u32[]', space=smem, size = 0x4, offset = 0x4, fixed_abs, tag = 'smem constant byte address 0x4 - core index']
  #allocation1 [shape = 'u32[144,128]{1,0:T(1,128)}', space=vmem, size = 0x12000, scoped, tag = 'internal scratch']
  #allocation2 [shape = 'f32[1]{0:T(128)S(6)}', space=smem, size = 0x200, scoped, tag = 'scoped memory for tpu_custom_call.1']
  %s0 = inlined_call_operand.<no memory space> [shape: f32[1], index: 0, kind: input, shape index: {}]
  %s1 = inlined_call_operand.hbm [shape: f32[2,4,256], index: 1, kind: input, shape index: {}]
  %s2 = inlined_call_operand.hbm [shape: f32[2,4,256], index: 2, kind: output, shape index: {}]
  %s3 = sld [smem:[#allocation0]]
  $region45: #{tpu_custom_call.1} parent=0
    _
  %s5 = ssub.s32 1, %s3
  %s6 = scalar_select 0, %s5, %s3
  %7 = sst [smem:[#allocation2]] %s0
  $region1: #{tpu_custom_call.1} parent=0
    #allocation3 [shape = 'u8[8192]{0}', space=vmem, size = 0x2000, scoped, tag = 'input window, operand 1']
    #allocation4 [shape = 's32[2]{0}', space=sflag, size = 0x8, scoped, tag = 'scoped memory for tpu_custom_call.1']
    #allocation5 [shape = 's32[2]{0}', space=sflag, size = 0x8, scoped, tag = 'scoped memory for tpu_custom_call.1']
    #allocation6 [shape = 'u8[8192]{0}', space=vmem, size = 0x2000, scoped, tag = 'output window, operand 0']
    %8 = vsyncpa [#allocation4], 0
    %s9 = scalar_lea.sflag [#allocation4], 1
    %10 = vsyncpa %s9, 0
    %11 = vsyncpa [#allocation5], 0
    %s12 = scalar_lea.sflag [#allocation5], 1
    %13 = vsyncpa %s12, 0
    loop: start=0, step=1, limit=4
    $region2: #{tpu_custom_call.1} parent=1 // loop_pre_header
      _
    $region3: #{tpu_custom_call.1} parent=1 // loop_header
      %s15 = sphi 0, %s19
      %p16 = scmp.ge.s32.totalorder %s15, 4
      %s23 = sphi 0, %s23
      %s25 = sphi 0, %s23
      %s26 = sphi 0, %s25
      %s40 = sphi 0, %s26
      %s46 = sphi 0, %s48
      %s49 = sphi 0, %s46
      %s50 = sphi 0, %s49
      %s66 = sphi 0, %s50
      %s72 = sphi 0, %s74
      %s75 = sphi 0, %s72
      %s76 = sphi 0, %s75
      %s92 = sphi 0, %s76
    $region4: #{tpu_custom_call.1} parent=1 // loop_header_branch
      %18 = sbr.rel (%p16) target = $region8
    $region5: #{tpu_custom_call.1} parent=1 // loop_body
      %s20 = ssub.s32 %s15, 1
      %s21 = ssub.s32 %s15, 2
      %s22 = sadd.s32 %s15, 1
      %s24 = sadd.s32 %s23, 1
      %p27 = scmp.eq.s32.totalorder %s15, 1
      %p28 = scmp.ne.s32.totalorder %s23, %s25
      %p29 = scmp.eq.s32.totalorder %s15, 0
      %p30 = por %p28, %p29
      %p31 = scmp.ne.s32.totalorder %s23, %s25
      %p32 = scmp.eq.s32.totalorder %s20, 1
      %p33 = por %p31, %p32
      %p34 = scmp.ne.s32.totalorder %s25, %s26
      %p35 = scmp.eq.s32.totalorder %s20, 0
      %p36 = por %p34, %p35
      %p37 = scmp.ne.s32.totalorder %s25, %s26
      %p38 = scmp.eq.s32.totalorder %s21, 1
      %p39 = por %p37, %p38
      %p41 = scmp.ne.s32.totalorder %s26, %s40
      %p42 = scmp.eq.s32.totalorder %s21, 0
      %p43 = por %p41, %p42
      %s44 = ssub.s32 %s15, %s22
      %p45 = scmp.eq.s32.totalorder %s44, 0
      %s47 = sadd.s32 %s46, 1
      %s48 = scalar_select %p45, %s46, %s47
      %p51 = pneg %p45
      %p52 = scmp.eq.s32.totalorder %s15, 1
      %p53 = por %p51, %p52
      %p54 = scmp.ne.s32.totalorder %s46, %s49
      %p55 = scmp.eq.s32.totalorder %s15, 0
      %p56 = por %p54, %p55
      %p57 = scmp.ne.s32.totalorder %s46, %s49
      %p58 = scmp.eq.s32.totalorder %s20, 1
      %p59 = por %p57, %p58
      %p60 = scmp.ne.s32.totalorder %s49, %s50
      %p61 = scmp.eq.s32.totalorder %s20, 0
      %p62 = por %p60, %p61
      %p63 = scmp.ne.s32.totalorder %s49, %s50
      %p64 = scmp.eq.s32.totalorder %s21, 1
      %p65 = por %p63, %p64
      %p67 = scmp.ne.s32.totalorder %s50, %s66
      %p68 = scmp.eq.s32.totalorder %s21, 0
      %p69 = por %p67, %p68
      %s70 = ssub.s32 %s15, %s22
      %p71 = scmp.eq.s32.totalorder %s70, 0
      %s73 = sadd.s32 %s72, 1
      %s74 = scalar_select %p71, %s72, %s73
      %p77 = pneg %p71
      %p78 = scmp.eq.s32.totalorder %s15, 1
      %p79 = por %p77, %p78
      %p80 = scmp.ne.s32.totalorder %s72, %s75
      %p81 = scmp.eq.s32.totalorder %s15, 0
      %p82 = por %p80, %p81
      %p83 = scmp.ne.s32.totalorder %s72, %s75
      %p84 = scmp.eq.s32.totalorder %s20, 1
      %p85 = por %p83, %p84
      %p86 = scmp.ne.s32.totalorder %s75, %s76
      %p87 = scmp.eq.s32.totalorder %s20, 0
      %p88 = por %p86, %p87
      %p89 = scmp.ne.s32.totalorder %s75, %s76
      %p90 = scmp.eq.s32.totalorder %s21, 1
      %p91 = por %p89, %p90
      %p93 = scmp.ne.s32.totalorder %s76, %s92
      %p94 = scmp.eq.s32.totalorder %s21, 0
      %p95 = por %p93, %p94
      %p96 = scmp.le.s32.totalorder 1, %s15
      %p97 = scmp.lt.s32.totalorder %s15, 3
      %p98 = pnand %p96, %p97
      %p99 = pneg %p98
      // Predicated region
      $region9: #{tpu_custom_call.1} parent=5 // pred_check
        _
      $region10: #{tpu_custom_call.1} parent=5 // pred_check_branch
        %101 = sbr.rel (%p98) target = $region12
      $region11: #{tpu_custom_call.1} parent=5 // pred_region
        %s102 = ssub.s32 %s15, 1
        // Predicated region
        $region13: #{tpu_custom_call.1} parent=11 // pred_check
          %p103 = pneg %p36
        $region14: #{tpu_custom_call.1} parent=11 // pred_check_branch
          %105 = sbr.rel (%p103) target = $region16
        $region15: #{tpu_custom_call.1} parent=11 // pred_region
          _
        $region16: #{tpu_custom_call.1} parent=11 // pred_fallthru
          _
      $region12: #{tpu_custom_call.1} parent=5 // pred_fallthru
        _
      %p106 = scmp.lt.s32.totalorder %s15, 2
      // Predicated region
      $region17: #{tpu_custom_call.1} parent=5 // pred_check
        %p107 = pneg %p106
      $region18: #{tpu_custom_call.1} parent=5 // pred_check_branch
        %109 = sbr.rel (%p107) target = $region20
      $region19: #{tpu_custom_call.1} parent=5 // pred_region
        // Predicated region
        $region21: #{tpu_custom_call.1} parent=19 // pred_check
          %p110 = pneg %p56
        $region22: #{tpu_custom_call.1} parent=19 // pred_check_branch
          %112 = sbr.rel (%p110) target = $region24
        $region23: #{tpu_custom_call.1} parent=19 // pred_region
          %s113 = sand.u32 %s46, 1
          %s114 = scalar_lea.sflag [#allocation4], %s113
          %s115 = sand.u32 %s46, 1
          %s116 = smul.addr %s115, 8
          %s117 = scalar_lea.vmem [#allocation3], %s116
          %s119 = ssub.s32 128, 128
          %120 = vsyncadd %s114, %s119
          %s121 = smul.addr %s15, 2
          %s122 = smul.addr %s121, 64
          %s123 = scalar_lea.hbm %s1, %s122
          %s125 = sshll.u32 %s117, 4
          %s126 = int_to_ptr.vmem [resolvable:$true] %s125
          %128 = dma.hbm_to_vmem [thread:$0]  %s123, 128, %s126, %s114
        $region24: #{tpu_custom_call.1} parent=19 // pred_fallthru
          _
      $region20: #{tpu_custom_call.1} parent=5 // pred_fallthru
        _
      %p129 = scmp.le.s32.totalorder 1, %s15
      %p130 = scmp.lt.s32.totalorder %s15, 3
      %p131 = pnand %p129, %p130
      %p132 = pneg %p131
      // Predicated region
      $region25: #{tpu_custom_call.1} parent=5 // pred_check
        _
      $region26: #{tpu_custom_call.1} parent=5 // pred_check_branch
        %134 = sbr.rel (%p131) target = $region28
      $region27: #{tpu_custom_call.1} parent=5 // pred_region
        %s135 = ssub.s32 %s15, 1
        %s136 = sand.u32 %s49, 1
        %s137 = scalar_lea.sflag [#allocation4], %s136
        %s138 = sand.u32 %s49, 1
        %s139 = smul.addr %s138, 8
        %s140 = scalar_lea.vmem [#allocation3], %s139
        // Predicated region
        $region29: #{tpu_custom_call.1} parent=27 // pred_check
          %p141 = pneg %p62
        $region30: #{tpu_custom_call.1} parent=27 // pred_check_branch
          %143 = sbr.rel (%p141) target = $region32
        $region31: #{tpu_custom_call.1} parent=27 // pred_region
          %144 = dma.done %s137, 128
        $region32: #{tpu_custom_call.1} parent=27 // pred_fallthru
          _
        %p145 = pneg %p36
        %p146 = pneg %p33
        %s147 = sand.u32 %s49, 1
        %s148 = scalar_lea.sflag [#allocation4], %s147
        %s149 = sand.u32 %s49, 1
        %s150 = smul.addr %s149, 8
        %s151 = scalar_lea.vmem [#allocation3], %s150
        %p152 = pneg %p62
        %p153 = pneg %p59
        %p154 = pneg %p88
        %p155 = pneg %p85
        %s156 = sand.u32 %s75, 1
        %s157 = scalar_lea.sflag [#allocation5], %s156
        %s158 = sand.u32 %s75, 1
        %s159 = smul.addr %s158, 8
        %s160 = scalar_lea.vmem [#allocation6], %s159
        %v162 = vld [vmem:[%s140] sm:$0xff]
        %v164 = vcombine.high %v162, %v162
        %166 = vmatprep.subr.mxu0 %v164
        %167 = vmatpush1.xpose.msra.mxu0 %v162
        %168 = vmatprep.subr.mxu0 0.0
        %169 = vmatpush1.xpose.msra.mxu0 0.0
        %170 = vmatprep.subr.mxu0 0.0
        %171 = vmatpush1.xpose.msra.mxu0 0.0
        %172 = vmatprep.subr.mxu0 0.0
        %173 = vmatpush1.xpose.msra.mxu0 0.0
        %174 = vmatprep.subr.mxu0 0.0
        %175 = vmatpush1.xpose.msra.mxu0 0.0
        %176 = vmatprep.subr.mxu0 0.0
        %177 = vmatpush1.xpose.msra.mxu0 0.0
        %178 = vmatprep.subr.mxu0 0.0
        %179 = vmatpush1.xpose.msra.mxu0 0.0
        %180 = vmatprep.subr.mxu0 0.0
        %181 = vmatpush1.xpose.msra.mxu0 0.0
        %182 = vmatprep.subr.mxu0 0.0
        %183 = vmatpush1.xpose.msra.mxu0 0.0
        %184 = vmatprep.subr.mxu0 0.0
        %185 = vmatpush1.xpose.msra.mxu0 0.0
        %186 = vmatprep.subr.mxu0 0.0
        %187 = vmatpush1.xpose.msra.mxu0 0.0
        %188 = vmatprep.subr.mxu0 0.0
        %189 = vmatpush1.xpose.msra.mxu0 0.0
        %190 = vmatprep.subr.mxu0 0.0
        %191 = vmatpush1.xpose.msra.mxu0 0.0
        %192 = vmatprep.subr.mxu0 0.0
        %193 = vmatpush1.xpose.msra.mxu0 0.0
        %194 = vmatprep.subr.mxu0 0.0
        %195 = vmatpush1.xpose.msra.mxu0 0.0
        %196 = vmatprep.subr.mxu0 0.0
        %197 = vmatpush1.xpose.msra.mxu0 0.0
        %198 = vmatprep.subr.mxu0 0.0
        %199 = vmatpush1.xpose.msra.mxu0 0.0
        %200 = vmatprep.subr.mxu0 0.0
        %201 = vmatpush1.xpose.msra.mxu0 0.0
        %202 = vmatprep.subr.mxu0 0.0
        %203 = vmatpush1.xpose.msra.mxu0 0.0
        %204 = vmatprep.subr.mxu0 0.0
        %205 = vmatpush1.xpose.msra.mxu0 0.0
        %206 = vmatprep.subr.mxu0 0.0
        %207 = vmatpush1.xpose.msra.mxu0 0.0
        %208 = vmatprep.subr.mxu0 0.0
        %209 = vmatpush1.xpose.msra.mxu0 0.0
        %210 = vmatprep.subr.mxu0 0.0
        %211 = vmatpush1.xpose.msra.mxu0 0.0
        %212 = vmatprep.subr.mxu0 0.0
        %213 = vmatpush1.xpose.msra.mxu0 0.0
        %214 = vmatprep.subr.mxu0 0.0
        %215 = vmatpush1.xpose.msra.mxu0 0.0
        %216 = vmatprep.subr.mxu0 0.0
        %217 = vmatpush1.xpose.msra.mxu0 0.0
        %218 = vmatprep.subr.mxu0 0.0
        %219 = vmatpush1.xpose.msra.mxu0 0.0
        %220 = vmatprep.subr.mxu0 0.0
        %221 = vmatpush1.xpose.msra.mxu0 0.0
        %222 = vmatprep.subr.mxu0 0.0
        %223 = vmatpush1.xpose.msra.mxu0 0.0
        %224 = vmatprep.subr.mxu0 0.0
        %225 = vmatpush1.xpose.msra.mxu0 0.0
        %226 = vmatprep.subr.mxu0 0.0
        %227 = vmatpush1.xpose.msra.mxu0 0.0
        %228 = vmatprep.subr.mxu0 0.0
        %229 = vmatpush1.xpose.msra.mxu0 0.0
        %230 = vmatprep.mubr.f32.mxu0 %v164
        %231 = vmatmul.mubr.f32.gmra.mrb[0].mxu0 %v162
        %v232 = vpop.f32.mrb[0].mxu0
        %v233 = vadd.f32 0.0, %v232
        %v234 = vpop.f32.mrb[0].mxu0
        %235 = vdwg.mxu0
        %vm236 = vcmask 27648
        %v237 = vsel %vm236, %v233, inf
        %238 = vmin.xlane.f32.xlu0 %v237
        %v239 = vpop.xlane.xlu0 %238
        %v240 = vsub.f32 %v239, %v233
        %v241 = vmul.f32 %v240, 1.442695
        %v242 = vpow.pop %v241
        %v243 = vsel %vm236, %v242, 0.0
        %244 = vadd.xlane.f32.xlu0 %v243
        %v245 = vpop.xlane.xlu0 %244
        %v246 = vrcp.pop %v245
        %v247 = vmul.f32 %v242, %v246
        %v248 = vpack.c.bf16 %v247, %v247
        %v249 = vpack.c.bf16 %v162, %v162
        %v250 = vpack.c.bf16 %v164, %v164
        %vm251 = vcmask 31744
        %v253 = vsel %vm251, %v248, 0
        %vm255 = vcmask 1041408
        %v257 = vsel %vm255, %v249, 0
        %v260 = vsel %vm255, %v250, 0
        %262 = vmatprep.subr.bf16.mxu0 %v260
        %263 = vmatpush1.bf16.msra.mxu0 %v257
        %264 = vmatprep.subr.bf16.mxu0 0
        %265 = vmatpush1.bf16.msra.mxu0 0
        %266 = vmatprep.subr.bf16.mxu0 0
        %267 = vmatpush1.bf16.msra.mxu0 0
        %268 = vmatprep.subr.bf16.mxu0 0
        %269 = vmatpush1.bf16.msra.mxu0 0
        %270 = vmatprep.subr.bf16.mxu0 0
        %271 = vmatpush1.bf16.msra.mxu0 0
        %272 = vmatprep.subr.bf16.mxu0 0
        %273 = vmatpush1.bf16.msra.mxu0 0
        %274 = vmatprep.subr.bf16.mxu0 0
        %275 = vmatpush1.bf16.msra.mxu0 0
        %276 = vmatprep.subr.bf16.mxu0 0
        %277 = vmatpush1.bf16.msra.mxu0 0
        %278 = vmatprep.subr.bf16.mxu0 0
        %279 = vmatpush1.bf16.msra.mxu0 0
        %280 = vmatprep.subr.bf16.mxu0 0
        %281 = vmatpush1.bf16.msra.mxu0 0
        %282 = vmatprep.subr.bf16.mxu0 0
        %283 = vmatpush1.bf16.msra.mxu0 0
        %284 = vmatprep.subr.bf16.mxu0 0
        %285 = vmatpush1.bf16.msra.mxu0 0
        %286 = vmatprep.subr.bf16.mxu0 0
        %287 = vmatpush1.bf16.msra.mxu0 0
        %288 = vmatprep.subr.bf16.mxu0 0
        %289 = vmatpush1.bf16.msra.mxu0 0
        %290 = vmatprep.subr.bf16.mxu0 0
        %291 = vmatpush1.bf16.msra.mxu0 0
        %292 = vmatprep.subr.bf16.mxu0 0
        %293 = vmatpush1.bf16.msra.mxu0 0
        %294 = vmatprep.mubr.bf16.mxu0 0
        %295 = vmatmul.mubr.bf16.gmra.mrb[0].mxu0 %v253
        %v296 = vpop.f32.mrb[0].mxu0
        %v297 = vadd.f32 0.0, %v296
        %v298 = vpop.f32.mrb[0].mxu0
        %v299 = vadd.f32 0.0, %v298
        %v300 = vpop.f32.mrb[0].mxu0
        %v301 = vpop.f32.mrb[0].mxu0
        %302 = vdwg.mxu0
        %s303 = sld [smem:[#allocation2]]
        %v304 = vstv %s303
        %v305 = vmul.f32 %v304, %v297
        %v306 = vmul.f32 %v304, %v299
        %v307 = vadd.f32 %v305, %v162
        %v308 = vadd.f32 %v306, %v164
        %v311 = vcombine.low %v307, %v308
        %313 = vst [vmem:[%s160] sm:$0xff] %v311
        %s314 = sand.u32 %s75, 1
        %s315 = scalar_lea.sflag [#allocation5], %s314
        %s316 = sand.u32 %s75, 1
        %s317 = smul.addr %s316, 8
        %s318 = scalar_lea.vmem [#allocation6], %s317
        // Predicated region
        $region33: #{tpu_custom_call.1} parent=27 // pred_check
          %p319 = pneg %p85
        $region34: #{tpu_custom_call.1} parent=27 // pred_check_branch
          %321 = sbr.rel (%p319) target = $region36
        $region35: #{tpu_custom_call.1} parent=27 // pred_region
          %s323 = ssub.s32 128, 128
          %324 = vsyncadd %s315, %s323
          %s325 = smul.addr %s20, 2
          %s326 = smul.addr %s325, 64
          %s327 = scalar_lea.hbm %s2, %s326
          %s329 = sshll.u32 %s318, 4
          %s330 = int_to_ptr.vmem [resolvable:$true] %s329
          %332 = dma.vmem_to_hbm [thread:$0]  %s330, 128, %s327, %s315
        $region36: #{tpu_custom_call.1} parent=27 // pred_fallthru
          _
      $region28: #{tpu_custom_call.1} parent=5 // pred_fallthru
        _
      %p333 = scmp.le.s32.totalorder 2, %s15
      // Predicated region
      $region37: #{tpu_custom_call.1} parent=5 // pred_check
        %p334 = pneg %p333
      $region38: #{tpu_custom_call.1} parent=5 // pred_check_branch
        %336 = sbr.rel (%p334) target = $region40
      $region39: #{tpu_custom_call.1} parent=5 // pred_region
        %s337 = ssub.s32 %s15, 2
        // Predicated region
        $region41: #{tpu_custom_call.1} parent=39 // pred_check
          %p338 = pneg %p91
        $region42: #{tpu_custom_call.1} parent=39 // pred_check_branch
          %340 = sbr.rel (%p338) target = $region44
        $region43: #{tpu_custom_call.1} parent=39 // pred_region
          %s341 = sand.u32 %s76, 1
          %s342 = scalar_lea.sflag [#allocation5], %s341
          %s343 = sand.u32 %s76, 1
          %s344 = smul.addr %s343, 8
          %s345 = scalar_lea.vmem [#allocation6], %s344
          %346 = dma.done %s342, 128
        $region44: #{tpu_custom_call.1} parent=39 // pred_fallthru
          _
      $region40: #{tpu_custom_call.1} parent=5 // pred_fallthru
        _
    $region6: #{tpu_custom_call.1} parent=1 // loop_footer
      %s19 = sadd.s32 1, %s15
    $region7: #{tpu_custom_call.1} parent=1 // loop_footer_branch
      %14 = sbr.rel target = $region3
    $region8: #{tpu_custom_call.1} parent=1 // loop_exit
      _
    %347 = vsyncpa [#allocation4], 1
    %s348 = scalar_lea.sflag [#allocation4], 1
    %349 = vsyncpa %s348, 1
    %350 = vsyncpa [#allocation5], 1
    %s351 = scalar_lea.sflag [#allocation5], 1
    %352 = vsyncpa %s351, 1

</llo_original>
